<compile_context>
chip_gen: v6e
topology: v6e:2x2x1
jax: 0.10.0
libtpu: 0.0.40
codegen_flags: <defaults>
</compile_context>

<pallas_src>
import functools

import jax
import jax.numpy as jnp
from jax.experimental import pallas as pl
from jax.experimental.pallas import tpu as pltpu

TM = 128     # node-row tile. v6e knob: 256 (fills the 2x256x256 MXU M dim).
LANE = 128   # channel dims padded to multiples of this (lane-dense output).


def _round_up(v, m):
    return (v + m - 1) // m * m


def _pick_tk(n_pad):
    """Largest K tile (<= 512) that divides the padded node count."""
    for tk in (512, 384, 256, 128):
        if n_pad % tk == 0:
            return tk
    return TM


# --------------------------------------------------------------------------
# GCN aggregation kernel:  out = act((A_rows @ feat) [@ W] + b)
#   grid = (row_block, k_block);  k is the contraction over source nodes.
# --------------------------------------------------------------------------
def _gcn_body(adj_ref, feat_ref, w_ref, b_ref, out_ref, acc_ref, *, relu):
    k = pl.program_id(1)
    tk = adj_ref.shape[1]

    @pl.when(k == 0)
    def _init():
        acc_ref[...] = jnp.zeros_like(acc_ref)

    # A[row_tile, k_tile] @ feat[k_tile, :]   (feat is resident in VMEM).
    k0 = pl.multiple_of(k * tk, tk)
    acc_ref[...] += jnp.dot(adj_ref[...], feat_ref[pl.ds(k0, tk), :],
                            preferred_element_type=jnp.float32)

    @pl.when(k == pl.num_programs(1) - 1)
    def _finalize():
        z = acc_ref[...]
        if w_ref is not None:                 # layer 2: (A @ H) @ W2
            z = jnp.dot(z, w_ref[...], preferred_element_type=jnp.float32)
        z = z + b_ref[...]
        if relu:
            z = jnp.maximum(z, 0.0)
        # dropout(p=0.5): eval-mode identity.
        out_ref[...] = z.astype(out_ref.dtype)


def _make_gcn_kernel(*, relu, project):
    if project:
        def kernel(adj_ref, feat_ref, w_ref, b_ref, out_ref, acc_ref):
            _gcn_body(adj_ref, feat_ref, w_ref, b_ref, out_ref, acc_ref,
                      relu=relu)
    else:
        def kernel(adj_ref, feat_ref, b_ref, out_ref, acc_ref):
            _gcn_body(adj_ref, feat_ref, None, b_ref, out_ref, acc_ref,
                      relu=relu)
    return kernel


def gcn_aggregate(adj, feat, bias, weight=None, *, relu=False,
                  out_dtype=jnp.float32):
    """out = act((adj @ feat) [@ weight] + bias), row- and K-tiled on TPU.

    adj    (n_pad, n_pad)  : streamed as (TM, TK) tiles (bf16 or f32)
    feat   (n_pad, c_feat) : resident in VMEM (constant block index)
    weight (c_feat, c_out) : optional, resident
    bias   (1, c_out)      : resident
    """
    n_pad = adj.shape[0]
    c_feat = feat.shape[1]
    c_out = weight.shape[1] if weight is not None else c_feat
    tk = _pick_tk(n_pad)
    rows, kt = n_pad // TM, n_pad // tk

    in_specs = [
        pl.BlockSpec((TM, tk), lambda i, k: (i, k)),          # A_hat tile
        pl.BlockSpec((n_pad, c_feat), lambda i, k: (0, 0)),   # feat (resident)
    ]
    args = [adj, feat]
    if weight is not None:
        in_specs.append(pl.BlockSpec((c_feat, c_out), lambda i, k: (0, 0)))
        args.append(weight)
    in_specs.append(pl.BlockSpec((1, c_out), lambda i, k: (0, 0)))
    args.append(bias)

    out_itemsize = jnp.dtype(out_dtype).itemsize

    # Explicit VMEM budget (review: compute it instead of a fixed 32 MiB).
    vmem_bytes = (
        2 * TM * tk * adj.dtype.itemsize            # adj tile, double-buffered
        + 2 * n_pad * c_feat * feat.dtype.itemsize  # resident feat (worst case)
        + 2 * TM * c_out * out_itemsize             # output tile
        + TM * c_feat * 4                           # f32 accumulator scratch
        + (2 * c_feat * c_out * 4 if weight is not None else 0)
        + 2 * LANE * c_out * 4                      # bias (padded row)
    )
    vmem_limit = int(min(vmem_bytes + (16 << 20), 100 << 20))

    flops = 2 * n_pad * n_pad * c_feat
    if weight is not None:
        flops += 2 * n_pad * c_feat * c_out
    bytes_accessed = int(
        adj.size * adj.dtype.itemsize + feat.size * feat.dtype.itemsize
        + n_pad * c_out * out_itemsize
        + (weight.size * weight.dtype.itemsize if weight is not None else 0)
        + bias.size * bias.dtype.itemsize)

    return pl.pallas_call(
        _make_gcn_kernel(relu=relu, project=weight is not None),
        out_shape=jax.ShapeDtypeStruct((n_pad, c_out), out_dtype),
        grid_spec=pltpu.PrefetchScalarGridSpec(
            num_scalar_prefetch=0,
            grid=(rows, kt),                        # reduction axis last
            in_specs=in_specs,
            out_specs=pl.BlockSpec((TM, c_out), lambda i, k: (i, 0)),
            scratch_shapes=[pltpu.VMEM((TM, c_feat), jnp.float32)],
        ),
        compiler_params=pltpu.CompilerParams(
            # Row blocks are independent -> shardable across TCs (v7x).
            dimension_semantics=("parallel", "arbitrary"),
            vmem_limit_bytes=vmem_limit,
        ),
        cost_estimate=pl.CostEstimate(flops=flops, transcendentals=0,
                                      bytes_accessed=bytes_accessed),
    )(*args)


# --------------------------------------------------------------------------
# Plain-JAX glue
# --------------------------------------------------------------------------
def build_norm_adj(edge_index, num_nodes):
    """Dense GCN-normalized adjacency: D^{-1/2} (A + I) D^{-1/2}.

    A_hat[i, j] corresponds to message flow j -> i (src=edge_index[0],
    dst=edge_index[1]), matching PyG GCNConv's source_to_target flow.
    """
    src, dst = edge_index[0], edge_index[1]
    a = jnp.zeros((num_nodes, num_nodes), jnp.float32)
    a = a.at[dst, src].add(1.0)                       # A[i, j] = #edges j -> i
    a = a + jnp.eye(num_nodes, dtype=jnp.float32)     # add self-loops
    deg = a.sum(axis=1)
    dinv = jnp.where(deg > 0, jax.lax.rsqrt(deg), 0.0)
    return dinv[:, None] * a * dinv[None, :]


def _pad2d(a, rows, cols):
    return jnp.pad(a, ((0, rows - a.shape[0]), (0, cols - a.shape[1])))


def glorot(key, fan_in, fan_out):
    limit = jnp.sqrt(6.0 / (fan_in + fan_out))
    return jax.random.uniform(key, (fan_in, fan_out), jnp.float32, -limit, limit)


def link_prediction_forward(x, edge_index, params, *,
                            compute_dtype=jnp.bfloat16):
    """Forward pass of LinkPredictionModel (== encode)."""
    n, _ = x.shape
    c_hid = params["w1"].shape[1]
    c_out = params["w2"].shape[1]

    n_pad = _round_up(n, TM)
    ch_p = _round_up(c_hid, LANE)
    co_p = _round_up(c_out, LANE)

    # Dense normalized adjacency, cast to the streaming dtype (bf16 default).
    adj = _pad2d(build_norm_adj(edge_index, n), n_pad, n_pad).astype(compute_dtype)

    # Hoisted layer-1 feature transform (tiny N x c_hid matmul, full f32).
    xw1 = jnp.dot(x, params["w1"], precision=jax.lax.Precision.HIGHEST)
    xw1 = _pad2d(xw1, n_pad, ch_p).astype(compute_dtype)
    b1 = _pad2d(params["b1"], 1, ch_p)
    w2 = _pad2d(params["w2"], ch_p, co_p)
    b2 = _pad2d(params["b2"], 1, co_p)

    # Layer 1: H = relu(A_hat @ (X W1) + b1).  H stored in compute_dtype so it
    # feeds layer 2's aggregation matmul at native MXU precision.
    h = gcn_aggregate(adj, xw1, b1, relu=True, out_dtype=compute_dtype)
    # dropout(p=0.5): eval-mode identity.
    # Layer 2: Z = (A_hat @ H) @ W2 + b2.
    z_pad = gcn_aggregate(adj, h, b2, weight=w2, relu=False,
                          out_dtype=jnp.float32)
    return z_pad[:n, :c_out]


# --------------------------------------------------------------------------
# Main
# --------------------------------------------------------------------------
if __name__ == "__main__":
    key = jax.random.PRNGKey(0)
    k_x, k_e, k_w1, k_w2 = jax.random.split(key, 4)

    num_nodes = 16
    in_channels = 8
    hidden_channels = 32
    out_channels = 16
    num_edges = 40

    x = jax.random.normal(k_x, (num_nodes, in_channels), jnp.float32)
    edge_index = jax.random.randint(k_e, (2, num_edges), 0, num_nodes, jnp.int32)

    params = {
        "w1": glorot(k_w1, in_channels, hidden_channels),
        "b1": jnp.zeros((1, hidden_channels), jnp.float32),
        "w2": glorot(k_w2, hidden_channels, out_channels),
        "b2": jnp.zeros((1, out_channels), jnp.float32),
    }

    # Plain-JAX reference (full precision matmuls).
    P = jax.lax.Precision.HIGHEST
    adj_ref = build_norm_adj(edge_index, num_nodes)
    h_ref = jnp.maximum(
        jnp.dot(adj_ref, jnp.dot(x, params["w1"], precision=P), precision=P)
        + params["b1"], 0.0)
    z_ref = (jnp.dot(adj_ref, jnp.dot(h_ref, params["w2"], precision=P),
                     precision=P) + params["b2"])

    fwd_f32 = jax.jit(functools.partial(link_prediction_forward,
                                        compute_dtype=jnp.float32))
    fwd_bf16 = jax.jit(functools.partial(link_prediction_forward,
                                         compute_dtype=jnp.bfloat16))

    z_f32 = fwd_f32(x, edge_index, params)
    jax.block_until_ready(z_f32)
    assert z_f32.shape == (num_nodes, out_channels)
    assert jnp.allclose(z_f32, z_ref, atol=5e-3, rtol=5e-3)

    z_bf16 = fwd_bf16(x, edge_index, params)
    jax.block_until_ready(z_bf16)
    assert z_bf16.shape == (num_nodes, out_channels)
    assert jnp.allclose(z_bf16, z_ref, atol=5e-2, rtol=5e-2)

    print("KERNEL_OK")
</pallas_src>

<mosaic_0001>
module attributes {stable_mosaic.version = 11 : i64} {
  func.func private @main(%arg0: i32) attributes {dimension_semantics = [#tpu.dimension_semantics<core_parallel>], iteration_bounds = array<i64: 2>, tpu.core_type = #tpu.core_type<sc_scalar_subcore>, window_params = []} {
    return
  }
}

module attributes {stable_mosaic.version = 11 : i64} {
  func.func private @main(%arg0: i32) attributes {dimension_semantics = [#tpu.dimension_semantics<core_parallel>], iteration_bounds = array<i64: 2>, tpu.core_type = #tpu.core_type<sc_scalar_subcore>, window_params = []} {
    return
  }
}

module attributes {stable_mosaic.version = 11 : i64} {
  func.func @kernel(%arg0: i32, %arg1: i32, %arg2: memref<128x128xf32, #tpu.memory_space<vmem>>, %arg3: memref<128x128xf32, #tpu.memory_space<vmem>>, %arg4: memref<128x128xf32, #tpu.memory_space<vmem>>, %arg5: memref<1x128xf32, #tpu.memory_space<vmem>>, %arg6: memref<128x128xf32, #tpu.memory_space<vmem>>, %arg7: memref<128x128xf32, #tpu.memory_space<vmem>>) attributes {dimension_semantics = [#tpu.dimension_semantics<parallel>, #tpu.dimension_semantics<arbitrary>], iteration_bounds = array<i64: 1, 1>, scalar_prefetch = 0 : i64, scratch_operands = 1 : i64, tpu.core_type = #tpu.core_type<tc>, window_params = [{transform_indices = @transform_0, window_bounds = array<i64: 128, 128>}, {pipeline_mode = #tpu.pipeline_mode<synchronous>, transform_indices = @transform_1, window_bounds = array<i64: 128, 128>}, {pipeline_mode = #tpu.pipeline_mode<synchronous>, transform_indices = @transform_2, window_bounds = array<i64: 128, 128>}, {pipeline_mode = #tpu.pipeline_mode<synchronous>, transform_indices = @transform_3, window_bounds = array<i64: 1, 128>}, {transform_indices = @transform_4, window_bounds = array<i64: 128, 128>}]} {
    %c0_i32 = arith.constant 0 : i32
    %0 = arith.cmpi eq, %arg1, %c0_i32 : i32
    %1 = arith.extui %0 : i1 to i32
    %c0_i32_0 = arith.constant 0 : i32
    %2 = arith.cmpi ne, %1, %c0_i32_0 : i32
    scf.if %2 {
      %cst_9 = arith.constant 0.000000e+00 : f32
      %15 = vector.broadcast %cst_9 : f32 to vector<128x128xf32>
      %c0_10 = arith.constant 0 : index
      %c0_11 = arith.constant 0 : index
      %16 = vector.load %arg7[%c0_10, %c0_11] : memref<128x128xf32, #tpu.memory_space<vmem>>, vector<128x128xf32>
      tpu.vector_store %arg7[%c0_10, %c0_11], %15 {strides = array<i32>} : memref<128x128xf32, #tpu.memory_space<vmem>>, vector<128x128xf32>,
    } else {
    }
    %c128_i32 = arith.constant 128 : i32
    %3 = arith.muli %arg1, %c128_i32 : i32
    %4 = tpu.assume_multiple %3, 128 : i32
    %c0 = arith.constant 0 : index
    %c0_1 = arith.constant 0 : index
    %5 = vector.load %arg7[%c0, %c0_1] : memref<128x128xf32, #tpu.memory_space<vmem>>, vector<128x128xf32>
    %c0_2 = arith.constant 0 : index
    %c0_3 = arith.constant 0 : index
    %6 = vector.load %arg2[%c0_2, %c0_3] : memref<128x128xf32, #tpu.memory_space<vmem>>, vector<128x128xf32>
    %7 = arith.index_cast %4 : i32 to index
    %c0_4 = arith.constant 0 : index
    %8 = vector.load %arg3[%7, %c0_4] : memref<128x128xf32, #tpu.memory_space<vmem>>, vector<128x128xf32>
    %cst = arith.constant dense<0.000000e+00> : vector<128x128xf32>
    %9 = tpu.matmul %6, %8, %cst {dimension_numbers = #tpu.dot_dimension_numbers<[1], [0], [0], [1], [0, 0, 1, 1], [], []>} : vector<128x128xf32>, vector<128x128xf32>, vector<128x128xf32> -> vector<128x128xf32>
    %10 = arith.addf %5, %9 : vector<128x128xf32>
    %c0_5 = arith.constant 0 : index
    %c0_6 = arith.constant 0 : index
    %11 = vector.load %arg7[%c0_5, %c0_6] : memref<128x128xf32, #tpu.memory_space<vmem>>, vector<128x128xf32>
    tpu.vector_store %arg7[%c0_5, %c0_6], %10 {strides = array<i32>} : memref<128x128xf32, #tpu.memory_space<vmem>>, vector<128x128xf32>,
    %c0_i32_7 = arith.constant 0 : i32
    %12 = arith.cmpi eq, %arg1, %c0_i32_7 : i32
    %13 = arith.extui %12 : i1 to i32
    %c0_i32_8 = arith.constant 0 : i32
    %14 = arith.cmpi ne, %13, %c0_i32_8 : i32
    scf.if %14 {
      %c0_9 = arith.constant 0 : index
      %c0_10 = arith.constant 0 : index
      %15 = vector.load %arg7[%c0_9, %c0_10] : memref<128x128xf32, #tpu.memory_space<vmem>>, vector<128x128xf32>
      %c0_11 = arith.constant 0 : index
      %c0_12 = arith.constant 0 : index
      %16 = vector.load %arg4[%c0_11, %c0_12] : memref<128x128xf32, #tpu.memory_space<vmem>>, vector<128x128xf32>
      %cst_13 = arith.constant dense<0.000000e+00> : vector<128x128xf32>
      %17 = tpu.matmul %15, %16, %cst_13 {dimension_numbers = #tpu.dot_dimension_numbers<[1], [0], [0], [1], [0, 0, 1, 1], [], []>} : vector<128x128xf32>, vector<128x128xf32>, vector<128x128xf32> -> vector<128x128xf32>
      %c0_14 = arith.constant 0 : index
      %c0_15 = arith.constant 0 : index
      %18 = vector.load %arg5[%c0_14, %c0_15] : memref<1x128xf32, #tpu.memory_space<vmem>>, vector<1x128xf32>
      %19 = vector.broadcast %18 : vector<1x128xf32> to vector<128x128xf32>
      %20 = arith.addf %17, %19 : vector<128x128xf32>
      %c0_16 = arith.constant 0 : index
      %c0_17 = arith.constant 0 : index
      %21 = vector.load %arg6[%c0_16, %c0_17] : memref<128x128xf32, #tpu.memory_space<vmem>>, vector<128x128xf32>
      tpu.vector_store %arg6[%c0_16, %c0_17], %20 {strides = array<i32>} : memref<128x128xf32, #tpu.memory_space<vmem>>, vector<128x128xf32>,
    } else {
    }
    return
  }
  func.func @transform_0(%arg0: i32, %arg1: i32) -> (i32, i32) {
    %c0_i32 = arith.constant 0 : i32
    return %arg0, %arg1 : i32, i32
  }
  func.func @transform_1(%arg0: i32, %arg1: i32) -> (i32, i32) {
    %c0_i32 = arith.constant 0 : i32
    %c0_i32_0 = arith.constant 0 : i32
    %c0_i32_1 = arith.constant 0 : i32
    return %c0_i32, %c0_i32_0 : i32, i32
  }
  func.func @transform_2(%arg0: i32, %arg1: i32) -> (i32, i32) {
    %c0_i32 = arith.constant 0 : i32
    %c0_i32_0 = arith.constant 0 : i32
    %c0_i32_1 = arith.constant 0 : i32
    return %c0_i32, %c0_i32_0 : i32, i32
  }
  func.func @transform_3(%arg0: i32, %arg1: i32) -> (i32, i32) {
    %c0_i32 = arith.constant 0 : i32
    %c0_i32_0 = arith.constant 0 : i32
    %c0_i32_1 = arith.constant 0 : i32
    return %c0_i32, %c0_i32_0 : i32, i32
  }
  func.func @transform_4(%arg0: i32, %arg1: i32) -> (i32, i32) {
    %c0_i32 = arith.constant 0 : i32
    %c0_i32_0 = arith.constant 0 : i32
    return %arg0, %c0_i32 : i32, i32
  }
}

module attributes {stable_mosaic.version = 11 : i64} {
  func.func @kernel(%arg0: i32, %arg1: i32, %arg2: memref<128x128xf32, #tpu.memory_space<vmem>>, %arg3: memref<128x128xf32, #tpu.memory_space<vmem>>, %arg4: memref<1x128xf32, #tpu.memory_space<vmem>>, %arg5: memref<128x128xf32, #tpu.memory_space<vmem>>, %arg6: memref<128x128xf32, #tpu.memory_space<vmem>>) attributes {dimension_semantics = [#tpu.dimension_semantics<parallel>, #tpu.dimension_semantics<arbitrary>], iteration_bounds = array<i64: 1, 1>, scalar_prefetch = 0 : i64, scratch_operands = 1 : i64, tpu.core_type = #tpu.core_type<tc>, window_params = [{transform_indices = @transform_0, window_bounds = array<i64: 128, 128>}, {pipeline_mode = #tpu.pipeline_mode<synchronous>, transform_indices = @transform_1, window_bounds = array<i64: 128, 128>}, {pipeline_mode = #tpu.pipeline_mode<synchronous>, transform_indices = @transform_2, window_bounds = array<i64: 1, 128>}, {transform_indices = @transform_3, window_bounds = array<i64: 128, 128>}]} {
    %c0_i32 = arith.constant 0 : i32
    %0 = arith.cmpi eq, %arg1, %c0_i32 : i32
    %1 = arith.extui %0 : i1 to i32
    %c0_i32_0 = arith.constant 0 : i32
    %2 = arith.cmpi ne, %1, %c0_i32_0 : i32
    scf.if %2 {
      %cst_9 = arith.constant 0.000000e+00 : f32
      %15 = vector.broadcast %cst_9 : f32 to vector<128x128xf32>
      %c0_10 = arith.constant 0 : index
      %c0_11 = arith.constant 0 : index
      %16 = vector.load %arg6[%c0_10, %c0_11] : memref<128x128xf32, #tpu.memory_space<vmem>>, vector<128x128xf32>
      tpu.vector_store %arg6[%c0_10, %c0_11], %15 {strides = array<i32>} : memref<128x128xf32, #tpu.memory_space<vmem>>, vector<128x128xf32>,
    } else {
    }
    %c128_i32 = arith.constant 128 : i32
    %3 = arith.muli %arg1, %c128_i32 : i32
    %4 = tpu.assume_multiple %3, 128 : i32
    %c0 = arith.constant 0 : index
    %c0_1 = arith.constant 0 : index
    %5 = vector.load %arg6[%c0, %c0_1] : memref<128x128xf32, #tpu.memory_space<vmem>>, vector<128x128xf32>
    %c0_2 = arith.constant 0 : index
    %c0_3 = arith.constant 0 : index
    %6 = vector.load %arg2[%c0_2, %c0_3] : memref<128x128xf32, #tpu.memory_space<vmem>>, vector<128x128xf32>
    %7 = arith.index_cast %4 : i32 to index
    %c0_4 = arith.constant 0 : index
    %8 = vector.load %arg3[%7, %c0_4] : memref<128x128xf32, #tpu.memory_space<vmem>>, vector<128x128xf32>
    %cst = arith.constant dense<0.000000e+00> : vector<128x128xf32>
    %9 = tpu.matmul %6, %8, %cst {dimension_numbers = #tpu.dot_dimension_numbers<[1], [0], [0], [1], [0, 0, 1, 1], [], []>} : vector<128x128xf32>, vector<128x128xf32>, vector<128x128xf32> -> vector<128x128xf32>
    %10 = arith.addf %5, %9 : vector<128x128xf32>
    %c0_5 = arith.constant 0 : index
    %c0_6 = arith.constant 0 : index
    %11 = vector.load %arg6[%c0_5, %c0_6] : memref<128x128xf32, #tpu.memory_space<vmem>>, vector<128x128xf32>
    tpu.vector_store %arg6[%c0_5, %c0_6], %10 {strides = array<i32>} : memref<128x128xf32, #tpu.memory_space<vmem>>, vector<128x128xf32>,
    %c0_i32_7 = arith.constant 0 : i32
    %12 = arith.cmpi eq, %arg1, %c0_i32_7 : i32
    %13 = arith.extui %12 : i1 to i32
    %c0_i32_8 = arith.constant 0 : i32
    %14 = arith.cmpi ne, %13, %c0_i32_8 : i32
    scf.if %14 {
      %c0_9 = arith.constant 0 : index
      %c0_10 = arith.constant 0 : index
      %15 = vector.load %arg6[%c0_9, %c0_10] : memref<128x128xf32, #tpu.memory_space<vmem>>, vector<128x128xf32>
      %c0_11 = arith.constant 0 : index
      %c0_12 = arith.constant 0 : index
      %16 = vector.load %arg4[%c0_11, %c0_12] : memref<1x128xf32, #tpu.memory_space<vmem>>, vector<1x128xf32>
      %17 = vector.broadcast %16 : vector<1x128xf32> to vector<128x128xf32>
      %18 = arith.addf %15, %17 : vector<128x128xf32>
      %cst_13 = arith.constant 0.000000e+00 : f32
      %19 = vector.broadcast %cst_13 : f32 to vector<128x128xf32>
      %20 = arith.maximumf %18, %19 : vector<128x128xf32>
      %c0_14 = arith.constant 0 : index
      %c0_15 = arith.constant 0 : index
      %21 = vector.load %arg5[%c0_14, %c0_15] : memref<128x128xf32, #tpu.memory_space<vmem>>, vector<128x128xf32>
      tpu.vector_store %arg5[%c0_14, %c0_15], %20 {strides = array<i32>} : memref<128x128xf32, #tpu.memory_space<vmem>>, vector<128x128xf32>,
    } else {
    }
    return
  }
  func.func @transform_0(%arg0: i32, %arg1: i32) -> (i32, i32) {
    %c0_i32 = arith.constant 0 : i32
    return %arg0, %arg1 : i32, i32
  }
  func.func @transform_1(%arg0: i32, %arg1: i32) -> (i32, i32) {
    %c0_i32 = arith.constant 0 : i32
    %c0_i32_0 = arith.constant 0 : i32
    %c0_i32_1 = arith.constant 0 : i32
    return %c0_i32, %c0_i32_0 : i32, i32
  }
  func.func @transform_2(%arg0: i32, %arg1: i32) -> (i32, i32) {
    %c0_i32 = arith.constant 0 : i32
    %c0_i32_0 = arith.constant 0 : i32
    %c0_i32_1 = arith.constant 0 : i32
    return %c0_i32, %c0_i32_0 : i32, i32
  }
  func.func @transform_3(%arg0: i32, %arg1: i32) -> (i32, i32) {
    %c0_i32 = arith.constant 0 : i32
    %c0_i32_0 = arith.constant 0 : i32
    return %arg0, %c0_i32 : i32, i32
  }
}

</mosaic_0001>

<llo_original>
// kernel: link_prediction_forward.2
$region0: #{link_prediction_forward.2}
  #allocation0 [shape = 'u32[]', space=smem, size = 0x4, offset = 0x4, fixed_abs, tag = 'smem constant byte address 0x4 - core index']
  #allocation1 [shape = 'u32[144,128]{1,0:T(1,128)}', space=vmem, size = 0x12000, scoped, tag = 'internal scratch']
  #allocation2 [shape = 'f32[128,128]{1,0:T(8,128)}', space=vmem, size = 0x10000, scoped, tag = 'scratch operand']
  %s0 = inlined_call_operand.vmem [shape: f32[128,128], index: 0, kind: input, shape index: {}]
  %s1 = inlined_call_operand.vmem [shape: f32[128,128], index: 1, kind: input, shape index: {}]
  %s2 = inlined_call_operand.vmem [shape: f32[1,128], index: 2, kind: input, shape index: {}]
  %s3 = inlined_call_operand.vmem [shape: f32[128,128], index: 3, kind: output, shape index: {}]
  %s4 = sld [smem:[#allocation0]]
  $region30: #{link_prediction_forward.2} parent=0
    _
  %s6 = ssub.s32 1, %s4
  %s7 = scalar_select 0, %s6, %s4
  // Predicated region
  $region2: #{link_prediction_forward.2} parent=0 // pred_check
    _
  $region3: #{link_prediction_forward.2} parent=0 // pred_check_branch
    %9 = sbr.rel (0) target = $region5
  $region4: #{link_prediction_forward.2} parent=0 // pred_region
    _
  $region5: #{link_prediction_forward.2} parent=0 // pred_fallthru
    _
  // Predicated region
  $region6: #{link_prediction_forward.2} parent=0 // pred_check
    _
  $region7: #{link_prediction_forward.2} parent=0 // pred_check_branch
    %11 = sbr.rel (0) target = $region9
  $region8: #{link_prediction_forward.2} parent=0 // pred_region
    _
  $region9: #{link_prediction_forward.2} parent=0 // pred_fallthru
    _
  // Predicated region
  $region10: #{link_prediction_forward.2} parent=0 // pred_check
    _
  $region11: #{link_prediction_forward.2} parent=0 // pred_check_branch
    %13 = sbr.rel (0) target = $region13
  $region12: #{link_prediction_forward.2} parent=0 // pred_region
    _
  $region13: #{link_prediction_forward.2} parent=0 // pred_fallthru
    _
  %p14 = scmp.eq.s32.totalorder 0, 0
  // Predicated region
  $region14: #{link_prediction_forward.2} parent=0 // pred_check
    %p15 = pneg %p14
  $region15: #{link_prediction_forward.2} parent=0 // pred_check_branch
    %17 = sbr.rel (%p15) target = $region17
  $region16: #{link_prediction_forward.2} parent=0 // pred_region
    %18 = vst [vmem:[#allocation2] sm:$0xff] 0.0
    %19 = vst [vmem:[#allocation2 + $0x8] sm:$0xff] 0.0
    %20 = vst [vmem:[#allocation2 + $0x10] sm:$0xff] 0.0
    %21 = vst [vmem:[#allocation2 + $0x18] sm:$0xff] 0.0
    %22 = vst [vmem:[#allocation2 + $0x20] sm:$0xff] 0.0
    %23 = vst [vmem:[#allocation2 + $0x28] sm:$0xff] 0.0
    %24 = vst [vmem:[#allocation2 + $0x30] sm:$0xff] 0.0
    %25 = vst [vmem:[#allocation2 + $0x38] sm:$0xff] 0.0
    %26 = vst [vmem:[#allocation2 + $0x40] sm:$0xff] 0.0
    %27 = vst [vmem:[#allocation2 + $0x48] sm:$0xff] 0.0
    %28 = vst [vmem:[#allocation2 + $0x50] sm:$0xff] 0.0
    %29 = vst [vmem:[#allocation2 + $0x58] sm:$0xff] 0.0
    %30 = vst [vmem:[#allocation2 + $0x60] sm:$0xff] 0.0
    %31 = vst [vmem:[#allocation2 + $0x68] sm:$0xff] 0.0
    %32 = vst [vmem:[#allocation2 + $0x70] sm:$0xff] 0.0
    %33 = vst [vmem:[#allocation2 + $0x78] sm:$0xff] 0.0
  $region17: #{link_prediction_forward.2} parent=0 // pred_fallthru
    _
  %s34 = smul.u32 0, 128
  %v35 = vld [vmem:[#allocation2] sm:$0xff]
  %v36 = vld [vmem:[#allocation2 + $0x8] sm:$0xff]
  %v37 = vld [vmem:[#allocation2 + $0x10] sm:$0xff]
  %v38 = vld [vmem:[#allocation2 + $0x18] sm:$0xff]
  %v39 = vld [vmem:[#allocation2 + $0x20] sm:$0xff]
  %v40 = vld [vmem:[#allocation2 + $0x28] sm:$0xff]
  %v41 = vld [vmem:[#allocation2 + $0x30] sm:$0xff]
  %v42 = vld [vmem:[#allocation2 + $0x38] sm:$0xff]
  %v43 = vld [vmem:[#allocation2 + $0x40] sm:$0xff]
  %v44 = vld [vmem:[#allocation2 + $0x48] sm:$0xff]
  %v45 = vld [vmem:[#allocation2 + $0x50] sm:$0xff]
  %v46 = vld [vmem:[#allocation2 + $0x58] sm:$0xff]
  %v47 = vld [vmem:[#allocation2 + $0x60] sm:$0xff]
  %v48 = vld [vmem:[#allocation2 + $0x68] sm:$0xff]
  %v49 = vld [vmem:[#allocation2 + $0x70] sm:$0xff]
  %v50 = vld [vmem:[#allocation2 + $0x78] sm:$0xff]
  %v51 = vld [vmem:[%s0] sm:$0xff]
  %v52 = vld [vmem:[%s0 + $0x8] sm:$0xff]
  %v53 = vld [vmem:[%s0 + $0x10] sm:$0xff]
  %v54 = vld [vmem:[%s0 + $0x18] sm:$0xff]
  %v55 = vld [vmem:[%s0 + $0x20] sm:$0xff]
  %v56 = vld [vmem:[%s0 + $0x28] sm:$0xff]
  %v57 = vld [vmem:[%s0 + $0x30] sm:$0xff]
  %v58 = vld [vmem:[%s0 + $0x38] sm:$0xff]
  %v59 = vld [vmem:[%s0 + $0x40] sm:$0xff]
  %v60 = vld [vmem:[%s0 + $0x48] sm:$0xff]
  %v61 = vld [vmem:[%s0 + $0x50] sm:$0xff]
  %v62 = vld [vmem:[%s0 + $0x58] sm:$0xff]
  %v63 = vld [vmem:[%s0 + $0x60] sm:$0xff]
  %v64 = vld [vmem:[%s0 + $0x68] sm:$0xff]
  %v65 = vld [vmem:[%s0 + $0x70] sm:$0xff]
  %v66 = vld [vmem:[%s0 + $0x78] sm:$0xff]
  %s67 = scalar_lea.vmem %s1, %s34
  %v68 = vld [vmem:[%s67] sm:$0xff]
  %v69 = vld [vmem:[%s67 + $0x8] sm:$0xff]
  %v70 = vld [vmem:[%s67 + $0x10] sm:$0xff]
  %v71 = vld [vmem:[%s67 + $0x18] sm:$0xff]
  %v72 = vld [vmem:[%s67 + $0x20] sm:$0xff]
  %v73 = vld [vmem:[%s67 + $0x28] sm:$0xff]
  %v74 = vld [vmem:[%s67 + $0x30] sm:$0xff]
  %v75 = vld [vmem:[%s67 + $0x38] sm:$0xff]
  %v76 = vld [vmem:[%s67 + $0x40] sm:$0xff]
  %v77 = vld [vmem:[%s67 + $0x48] sm:$0xff]
  %v78 = vld [vmem:[%s67 + $0x50] sm:$0xff]
  %v79 = vld [vmem:[%s67 + $0x58] sm:$0xff]
  %v80 = vld [vmem:[%s67 + $0x60] sm:$0xff]
  %v81 = vld [vmem:[%s67 + $0x68] sm:$0xff]
  %v82 = vld [vmem:[%s67 + $0x70] sm:$0xff]
  %v83 = vld [vmem:[%s67 + $0x78] sm:$0xff]
  %84 = vmatprep.subr.mxu0 0.0
  %85 = vmatpush1.msra.mxu0 %v83
  %86 = vmatprep.subr.mxu0 0.0
  %87 = vmatpush1.msra.mxu0 %v82
  %88 = vmatprep.subr.mxu0 0.0
  %89 = vmatpush1.msra.mxu0 %v81
  %90 = vmatprep.subr.mxu0 0.0
  %91 = vmatpush1.msra.mxu0 %v80
  %92 = vmatprep.subr.mxu0 0.0
  %93 = vmatpush1.msra.mxu0 %v79
  %94 = vmatprep.subr.mxu0 0.0
  %95 = vmatpush1.msra.mxu0 %v78
  %96 = vmatprep.subr.mxu0 0.0
  %97 = vmatpush1.msra.mxu0 %v77
  %98 = vmatprep.subr.mxu0 0.0
  %99 = vmatpush1.msra.mxu0 %v76
  %100 = vmatprep.subr.mxu0 0.0
  %101 = vmatpush1.msra.mxu0 %v75
  %102 = vmatprep.subr.mxu0 0.0
  %103 = vmatpush1.msra.mxu0 %v74
  %104 = vmatprep.subr.mxu0 0.0
  %105 = vmatpush1.msra.mxu0 %v73
  %106 = vmatprep.subr.mxu0 0.0
  %107 = vmatpush1.msra.mxu0 %v72
  %108 = vmatprep.subr.mxu0 0.0
  %109 = vmatpush1.msra.mxu0 %v71
  %110 = vmatprep.subr.mxu0 0.0
  %111 = vmatpush1.msra.mxu0 %v70
  %112 = vmatprep.subr.mxu0 0.0
  %113 = vmatpush1.msra.mxu0 %v69
  %114 = vmatprep.subr.mxu0 0.0
  %115 = vmatpush1.msra.mxu0 %v68
  %116 = vmatprep.subr.mxu0 0.0
  %117 = vmatpush2.msra.mxu0 0.0
  %118 = vmatprep.subr.mxu0 0.0
  %119 = vmatpush2.msra.mxu0 0.0
  %120 = vmatprep.subr.mxu0 0.0
  %121 = vmatpush2.msra.mxu0 0.0
  %122 = vmatprep.subr.mxu0 0.0
  %123 = vmatpush2.msra.mxu0 0.0
  %124 = vmatprep.subr.mxu0 0.0
  %125 = vmatpush2.msra.mxu0 0.0
  %126 = vmatprep.subr.mxu0 0.0
  %127 = vmatpush2.msra.mxu0 0.0
  %128 = vmatprep.subr.mxu0 0.0
  %129 = vmatpush2.msra.mxu0 0.0
  %130 = vmatprep.subr.mxu0 0.0
  %131 = vmatpush2.msra.mxu0 0.0
  %132 = vmatprep.subr.mxu0 0.0
  %133 = vmatpush2.msra.mxu0 0.0
  %134 = vmatprep.subr.mxu0 0.0
  %135 = vmatpush2.msra.mxu0 0.0
  %136 = vmatprep.subr.mxu0 0.0
  %137 = vmatpush2.msra.mxu0 0.0
  %138 = vmatprep.subr.mxu0 0.0
  %139 = vmatpush2.msra.mxu0 0.0
  %140 = vmatprep.subr.mxu0 0.0
  %141 = vmatpush2.msra.mxu0 0.0
  %142 = vmatprep.subr.mxu0 0.0
  %143 = vmatpush2.msra.mxu0 0.0
  %144 = vmatprep.subr.mxu0 0.0
  %145 = vmatpush2.msra.mxu0 0.0
  %146 = vmatprep.subr.mxu0 0.0
  %147 = vmatpush2.msra.mxu0 0.0
  %148 = vmatprep.mubr.f32.mxu0 0.0
  %149 = vmatmul.mubr.f32.gmra.mxu0 %v51
  %v150 = vpop.f32.mrf.mxu0
  %v151 = vadd.f32 0.0, %v150
  %v152 = vpop.f32.mrf.mxu0
  %153 = vmatprep.mubr.f32.mxu0 0.0
  %154 = vmatmul.mubr.f32.gmra.mxu0 %v52
  %v155 = vpop.f32.mrf.mxu0
  %v156 = vadd.f32 0.0, %v155
  %v157 = vpop.f32.mrf.mxu0
  %158 = vmatprep.mubr.f32.mxu0 0.0
  %159 = vmatmul.mubr.f32.gmra.mxu0 %v53
  %v160 = vpop.f32.mrf.mxu0
  %v161 = vadd.f32 0.0, %v160
  %v162 = vpop.f32.mrf.mxu0
  %163 = vmatprep.mubr.f32.mxu0 0.0
  %164 = vmatmul.mubr.f32.gmra.mxu0 %v54
  %v165 = vpop.f32.mrf.mxu0
  %v166 = vadd.f32 0.0, %v165
  %v167 = vpop.f32.mrf.mxu0
  %168 = vmatprep.mubr.f32.mxu0 0.0
  %169 = vmatmul.mubr.f32.gmra.mxu0 %v55
  %v170 = vpop.f32.mrf.mxu0
  %v171 = vadd.f32 0.0, %v170
  %v172 = vpop.f32.mrf.mxu0
  %173 = vmatprep.mubr.f32.mxu0 0.0
  %174 = vmatmul.mubr.f32.gmra.mxu0 %v56
  %v175 = vpop.f32.mrf.mxu0
  %v176 = vadd.f32 0.0, %v175
  %v177 = vpop.f32.mrf.mxu0
  %178 = vmatprep.mubr.f32.mxu0 0.0
  %179 = vmatmul.mubr.f32.gmra.mxu0 %v57
  %v180 = vpop.f32.mrf.mxu0
  %v181 = vadd.f32 0.0, %v180
  %v182 = vpop.f32.mrf.mxu0
  %183 = vmatprep.mubr.f32.mxu0 0.0
  %184 = vmatmul.mubr.f32.gmra.mxu0 %v58
  %v185 = vpop.f32.mrf.mxu0
  %v186 = vadd.f32 0.0, %v185
  %v187 = vpop.f32.mrf.mxu0
  %188 = vmatprep.mubr.f32.mxu0 0.0
  %189 = vmatmul.mubr.f32.gmra.mxu0 %v59
  %v190 = vpop.f32.mrf.mxu0
  %v191 = vadd.f32 0.0, %v190
  %v192 = vpop.f32.mrf.mxu0
  %193 = vmatprep.mubr.f32.mxu0 0.0
  %194 = vmatmul.mubr.f32.gmra.mxu0 %v60
  %v195 = vpop.f32.mrf.mxu0
  %v196 = vadd.f32 0.0, %v195
  %v197 = vpop.f32.mrf.mxu0
  %198 = vmatprep.mubr.f32.mxu0 0.0
  %199 = vmatmul.mubr.f32.gmra.mxu0 %v61
  %v200 = vpop.f32.mrf.mxu0
  %v201 = vadd.f32 0.0, %v200
  %v202 = vpop.f32.mrf.mxu0
  %203 = vmatprep.mubr.f32.mxu0 0.0
  %204 = vmatmul.mubr.f32.gmra.mxu0 %v62
  %v205 = vpop.f32.mrf.mxu0
  %v206 = vadd.f32 0.0, %v205
  %v207 = vpop.f32.mrf.mxu0
  %208 = vmatprep.mubr.f32.mxu0 0.0
  %209 = vmatmul.mubr.f32.gmra.mxu0 %v63
  %v210 = vpop.f32.mrf.mxu0
  %v211 = vadd.f32 0.0, %v210
  %v212 = vpop.f32.mrf.mxu0
  %213 = vmatprep.mubr.f32.mxu0 0.0
  %214 = vmatmul.mubr.f32.gmra.mxu0 %v64
  %v215 = vpop.f32.mrf.mxu0
  %v216 = vadd.f32 0.0, %v215
  %v217 = vpop.f32.mrf.mxu0
  %218 = vmatprep.mubr.f32.mxu0 0.0
  %219 = vmatmul.mubr.f32.gmra.mxu0 %v65
  %v220 = vpop.f32.mrf.mxu0
  %v221 = vadd.f32 0.0, %v220
  %v222 = vpop.f32.mrf.mxu0
  %223 = vmatprep.mubr.f32.mxu0 0.0
  %224 = vmatmul.mubr.f32.gmra.mxu0 %v66
  %v225 = vpop.f32.mrf.mxu0
  %v226 = vadd.f32 0.0, %v225
  %v227 = vpop.f32.mrf.mxu0
  %228 = vdwg.mxu0
  %v229 = vadd.f32 %v35, %v151
  %v230 = vadd.f32 %v36, %v156
  %v231 = vadd.f32 %v37, %v161
  %v232 = vadd.f32 %v38, %v166
  %v233 = vadd.f32 %v39, %v171
  %v234 = vadd.f32 %v40, %v176
  %v235 = vadd.f32 %v41, %v181
  %v236 = vadd.f32 %v42, %v186
  %v237 = vadd.f32 %v43, %v191
  %v238 = vadd.f32 %v44, %v196
  %v239 = vadd.f32 %v45, %v201
  %v240 = vadd.f32 %v46, %v206
  %v241 = vadd.f32 %v47, %v211
  %v242 = vadd.f32 %v48, %v216
  %v243 = vadd.f32 %v49, %v221
  %v244 = vadd.f32 %v50, %v226
  %245 = vst [vmem:[#allocation2] sm:$0xff] %v229
  %246 = vst [vmem:[#allocation2 + $0x8] sm:$0xff] %v230
  %247 = vst [vmem:[#allocation2 + $0x10] sm:$0xff] %v231
  %248 = vst [vmem:[#allocation2 + $0x18] sm:$0xff] %v232
  %249 = vst [vmem:[#allocation2 + $0x20] sm:$0xff] %v233
  %250 = vst [vmem:[#allocation2 + $0x28] sm:$0xff] %v234
  %251 = vst [vmem:[#allocation2 + $0x30] sm:$0xff] %v235
  %252 = vst [vmem:[#allocation2 + $0x38] sm:$0xff] %v236
  %253 = vst [vmem:[#allocation2 + $0x40] sm:$0xff] %v237
  %254 = vst [vmem:[#allocation2 + $0x48] sm:$0xff] %v238
  %255 = vst [vmem:[#allocation2 + $0x50] sm:$0xff] %v239
  %256 = vst [vmem:[#allocation2 + $0x58] sm:$0xff] %v240
  %257 = vst [vmem:[#allocation2 + $0x60] sm:$0xff] %v241
  %258 = vst [vmem:[#allocation2 + $0x68] sm:$0xff] %v242
  %259 = vst [vmem:[#allocation2 + $0x70] sm:$0xff] %v243
  %260 = vst [vmem:[#allocation2 + $0x78] sm:$0xff] %v244
  // Predicated region
  $region18: #{link_prediction_forward.2} parent=0 // pred_check
    %p261 = pneg %p14
  $region19: #{link_prediction_forward.2} parent=0 // pred_check_branch
    %263 = sbr.rel (%p261) target = $region21
  $region20: #{link_prediction_forward.2} parent=0 // pred_region
    %v264 = vld [vmem:[#allocation2] sm:$0xff]
    %v265 = vld [vmem:[#allocation2 + $0x8] sm:$0xff]
    %v266 = vld [vmem:[#allocation2 + $0x10] sm:$0xff]
    %v267 = vld [vmem:[#allocation2 + $0x18] sm:$0xff]
    %v268 = vld [vmem:[#allocation2 + $0x20] sm:$0xff]
    %v269 = vld [vmem:[#allocation2 + $0x28] sm:$0xff]
    %v270 = vld [vmem:[#allocation2 + $0x30] sm:$0xff]
    %v271 = vld [vmem:[#allocation2 + $0x38] sm:$0xff]
    %v272 = vld [vmem:[#allocation2 + $0x40] sm:$0xff]
    %v273 = vld [vmem:[#allocation2 + $0x48] sm:$0xff]
    %v274 = vld [vmem:[#allocation2 + $0x50] sm:$0xff]
    %v275 = vld [vmem:[#allocation2 + $0x58] sm:$0xff]
    %v276 = vld [vmem:[#allocation2 + $0x60] sm:$0xff]
    %v277 = vld [vmem:[#allocation2 + $0x68] sm:$0xff]
    %v278 = vld [vmem:[#allocation2 + $0x70] sm:$0xff]
    %v279 = vld [vmem:[#allocation2 + $0x78] sm:$0xff]
    %v280 = vld [vmem:[%s2] sm:$0x1]
    %v282 = vlaneseq
    %v283 = vshrl.u32 %v282, 7
    %v284 = vsub.s32 0, %v283
    %v285 = vrot.slane %v280, %v284
    %v287 = vadd.f32 %v264, %v285
    %v288 = vadd.f32 %v265, %v285
    %v289 = vadd.f32 %v266, %v285
    %v290 = vadd.f32 %v267, %v285
    %v291 = vadd.f32 %v268, %v285
    %v292 = vadd.f32 %v269, %v285
    %v293 = vadd.f32 %v270, %v285
    %v294 = vadd.f32 %v271, %v285
    %v295 = vadd.f32 %v272, %v285
    %v296 = vadd.f32 %v273, %v285
    %v297 = vadd.f32 %v274, %v285
    %v298 = vadd.f32 %v275, %v285
    %v299 = vadd.f32 %v276, %v285
    %v300 = vadd.f32 %v277, %v285
    %v301 = vadd.f32 %v278, %v285
    %v302 = vadd.f32 %v279, %v285
    %v303 = vmax.f32 %v287, 0.0
    %v304 = vmax.f32 %v288, 0.0
    %v305 = vmax.f32 %v289, 0.0
    %v306 = vmax.f32 %v290, 0.0
    %v307 = vmax.f32 %v291, 0.0
    %v308 = vmax.f32 %v292, 0.0
    %v309 = vmax.f32 %v293, 0.0
    %v310 = vmax.f32 %v294, 0.0
    %v311 = vmax.f32 %v295, 0.0
    %v312 = vmax.f32 %v296, 0.0
    %v313 = vmax.f32 %v297, 0.0
    %v314 = vmax.f32 %v298, 0.0
    %v315 = vmax.f32 %v299, 0.0
    %v316 = vmax.f32 %v300, 0.0
    %v317 = vmax.f32 %v301, 0.0
    %v318 = vmax.f32 %v302, 0.0
    %319 = vst [vmem:[%s3] sm:$0xff] %v303
    %320 = vst [vmem:[%s3 + $0x8] sm:$0xff] %v304
    %321 = vst [vmem:[%s3 + $0x10] sm:$0xff] %v305
    %322 = vst [vmem:[%s3 + $0x18] sm:$0xff] %v306
    %323 = vst [vmem:[%s3 + $0x20] sm:$0xff] %v307
    %324 = vst [vmem:[%s3 + $0x28] sm:$0xff] %v308
    %325 = vst [vmem:[%s3 + $0x30] sm:$0xff] %v309
    %326 = vst [vmem:[%s3 + $0x38] sm:$0xff] %v310
    %327 = vst [vmem:[%s3 + $0x40] sm:$0xff] %v311
    %328 = vst [vmem:[%s3 + $0x48] sm:$0xff] %v312
    %329 = vst [vmem:[%s3 + $0x50] sm:$0xff] %v313
    %330 = vst [vmem:[%s3 + $0x58] sm:$0xff] %v314
    %331 = vst [vmem:[%s3 + $0x60] sm:$0xff] %v315
    %332 = vst [vmem:[%s3 + $0x68] sm:$0xff] %v316
    %333 = vst [vmem:[%s3 + $0x70] sm:$0xff] %v317
    %334 = vst [vmem:[%s3 + $0x78] sm:$0xff] %v318
  $region21: #{link_prediction_forward.2} parent=0 // pred_fallthru
    _
  // Predicated region
  $region22: #{link_prediction_forward.2} parent=0 // pred_check
    _
  $region23: #{link_prediction_forward.2} parent=0 // pred_check_branch
    %336 = sbr.rel (0) target = $region25
  $region24: #{link_prediction_forward.2} parent=0 // pred_region
    _
  $region25: #{link_prediction_forward.2} parent=0 // pred_fallthru
    _
  // Predicated region
  $region26: #{link_prediction_forward.2} parent=0 // pred_check
    _
  $region27: #{link_prediction_forward.2} parent=0 // pred_check_branch
    %338 = sbr.rel (0) target = $region29
  $region28: #{link_prediction_forward.2} parent=0 // pred_region
    _
  $region29: #{link_prediction_forward.2} parent=0 // pred_fallthru
    _

// kernel: link_prediction_forward.3
$region0: #{link_prediction_forward.3}
  #allocation0 [shape = 'u32[]', space=smem, size = 0x4, offset = 0x4, fixed_abs, tag = 'smem constant byte address 0x4 - core index']
  #allocation1 [shape = 'u32[144,128]{1,0:T(1,128)}', space=vmem, size = 0x12000, scoped, tag = 'internal scratch']
  #allocation2 [shape = 'f32[128,128]{1,0:T(8,128)}', space=vmem, size = 0x10000, scoped, tag = 'scratch operand']
  %s0 = inlined_call_operand.vmem [shape: f32[128,128], index: 0, kind: input, shape index: {}]
  %s1 = inlined_call_operand.vmem [shape: f32[128,128], index: 1, kind: input, shape index: {}]
  %s2 = inlined_call_operand.vmem [shape: f32[128,128], index: 2, kind: input, shape index: {}]
  %s3 = inlined_call_operand.vmem [shape: f32[1,128], index: 3, kind: input, shape index: {}]
  %s4 = inlined_call_operand.vmem [shape: f32[128,128], index: 4, kind: output, shape index: {}]
  %s5 = sld [smem:[#allocation0]]
  $region34: #{link_prediction_forward.3} parent=0
    _
  %s7 = ssub.s32 1, %s5
  %s8 = scalar_select 0, %s7, %s5
  // Predicated region
  $region2: #{link_prediction_forward.3} parent=0 // pred_check
    _
  $region3: #{link_prediction_forward.3} parent=0 // pred_check_branch
    %10 = sbr.rel (0) target = $region5
  $region4: #{link_prediction_forward.3} parent=0 // pred_region
    _
  $region5: #{link_prediction_forward.3} parent=0 // pred_fallthru
    _
  // Predicated region
  $region6: #{link_prediction_forward.3} parent=0 // pred_check
    _
  $region7: #{link_prediction_forward.3} parent=0 // pred_check_branch
    %12 = sbr.rel (0) target = $region9
  $region8: #{link_prediction_forward.3} parent=0 // pred_region
    _
  $region9: #{link_prediction_forward.3} parent=0 // pred_fallthru
    _
  // Predicated region
  $region10: #{link_prediction_forward.3} parent=0 // pred_check
    _
  $region11: #{link_prediction_forward.3} parent=0 // pred_check_branch
    %14 = sbr.rel (0) target = $region13
  $region12: #{link_prediction_forward.3} parent=0 // pred_region
    _
  $region13: #{link_prediction_forward.3} parent=0 // pred_fallthru
    _
  // Predicated region
  $region14: #{link_prediction_forward.3} parent=0 // pred_check
    _
  $region15: #{link_prediction_forward.3} parent=0 // pred_check_branch
    %16 = sbr.rel (0) target = $region17
  $region16: #{link_prediction_forward.3} parent=0 // pred_region
    _
  $region17: #{link_prediction_forward.3} parent=0 // pred_fallthru
    _
  %p17 = scmp.eq.s32.totalorder 0, 0
  // Predicated region
  $region18: #{link_prediction_forward.3} parent=0 // pred_check
    %p18 = pneg %p17
  $region19: #{link_prediction_forward.3} parent=0 // pred_check_branch
    %20 = sbr.rel (%p18) target = $region21
  $region20: #{link_prediction_forward.3} parent=0 // pred_region
    %21 = vst [vmem:[#allocation2] sm:$0xff] 0.0
    %22 = vst [vmem:[#allocation2 + $0x8] sm:$0xff] 0.0
    %23 = vst [vmem:[#allocation2 + $0x10] sm:$0xff] 0.0
    %24 = vst [vmem:[#allocation2 + $0x18] sm:$0xff] 0.0
    %25 = vst [vmem:[#allocation2 + $0x20] sm:$0xff] 0.0
    %26 = vst [vmem:[#allocation2 + $0x28] sm:$0xff] 0.0
    %27 = vst [vmem:[#allocation2 + $0x30] sm:$0xff] 0.0
    %28 = vst [vmem:[#allocation2 + $0x38] sm:$0xff] 0.0
    %29 = vst [vmem:[#allocation2 + $0x40] sm:$0xff] 0.0
    %30 = vst [vmem:[#allocation2 + $0x48] sm:$0xff] 0.0
    %31 = vst [vmem:[#allocation2 + $0x50] sm:$0xff] 0.0
    %32 = vst [vmem:[#allocation2 + $0x58] sm:$0xff] 0.0
    %33 = vst [vmem:[#allocation2 + $0x60] sm:$0xff] 0.0
    %34 = vst [vmem:[#allocation2 + $0x68] sm:$0xff] 0.0
    %35 = vst [vmem:[#allocation2 + $0x70] sm:$0xff] 0.0
    %36 = vst [vmem:[#allocation2 + $0x78] sm:$0xff] 0.0
  $region21: #{link_prediction_forward.3} parent=0 // pred_fallthru
    _
  %s37 = smul.u32 0, 128
  %v38 = vld [vmem:[#allocation2] sm:$0xff]
  %v39 = vld [vmem:[#allocation2 + $0x8] sm:$0xff]
  %v40 = vld [vmem:[#allocation2 + $0x10] sm:$0xff]
  %v41 = vld [vmem:[#allocation2 + $0x18] sm:$0xff]
  %v42 = vld [vmem:[#allocation2 + $0x20] sm:$0xff]
  %v43 = vld [vmem:[#allocation2 + $0x28] sm:$0xff]
  %v44 = vld [vmem:[#allocation2 + $0x30] sm:$0xff]
  %v45 = vld [vmem:[#allocation2 + $0x38] sm:$0xff]
  %v46 = vld [vmem:[#allocation2 + $0x40] sm:$0xff]
  %v47 = vld [vmem:[#allocation2 + $0x48] sm:$0xff]
  %v48 = vld [vmem:[#allocation2 + $0x50] sm:$0xff]
  %v49 = vld [vmem:[#allocation2 + $0x58] sm:$0xff]
  %v50 = vld [vmem:[#allocation2 + $0x60] sm:$0xff]
  %v51 = vld [vmem:[#allocation2 + $0x68] sm:$0xff]
  %v52 = vld [vmem:[#allocation2 + $0x70] sm:$0xff]
  %v53 = vld [vmem:[#allocation2 + $0x78] sm:$0xff]
  %v54 = vld [vmem:[%s0] sm:$0xff]
  %v55 = vld [vmem:[%s0 + $0x8] sm:$0xff]
  %v56 = vld [vmem:[%s0 + $0x10] sm:$0xff]
  %v57 = vld [vmem:[%s0 + $0x18] sm:$0xff]
  %v58 = vld [vmem:[%s0 + $0x20] sm:$0xff]
  %v59 = vld [vmem:[%s0 + $0x28] sm:$0xff]
  %v60 = vld [vmem:[%s0 + $0x30] sm:$0xff]
  %v61 = vld [vmem:[%s0 + $0x38] sm:$0xff]
  %v62 = vld [vmem:[%s0 + $0x40] sm:$0xff]
  %v63 = vld [vmem:[%s0 + $0x48] sm:$0xff]
  %v64 = vld [vmem:[%s0 + $0x50] sm:$0xff]
  %v65 = vld [vmem:[%s0 + $0x58] sm:$0xff]
  %v66 = vld [vmem:[%s0 + $0x60] sm:$0xff]
  %v67 = vld [vmem:[%s0 + $0x68] sm:$0xff]
  %v68 = vld [vmem:[%s0 + $0x70] sm:$0xff]
  %v69 = vld [vmem:[%s0 + $0x78] sm:$0xff]
  %s70 = scalar_lea.vmem %s1, %s37
  %v71 = vld [vmem:[%s70] sm:$0xff]
  %v72 = vld [vmem:[%s70 + $0x8] sm:$0xff]
  %v73 = vld [vmem:[%s70 + $0x10] sm:$0xff]
  %v74 = vld [vmem:[%s70 + $0x18] sm:$0xff]
  %v75 = vld [vmem:[%s70 + $0x20] sm:$0xff]
  %v76 = vld [vmem:[%s70 + $0x28] sm:$0xff]
  %v77 = vld [vmem:[%s70 + $0x30] sm:$0xff]
  %v78 = vld [vmem:[%s70 + $0x38] sm:$0xff]
  %v79 = vld [vmem:[%s70 + $0x40] sm:$0xff]
  %v80 = vld [vmem:[%s70 + $0x48] sm:$0xff]
  %v81 = vld [vmem:[%s70 + $0x50] sm:$0xff]
  %v82 = vld [vmem:[%s70 + $0x58] sm:$0xff]
  %v83 = vld [vmem:[%s70 + $0x60] sm:$0xff]
  %v84 = vld [vmem:[%s70 + $0x68] sm:$0xff]
  %v85 = vld [vmem:[%s70 + $0x70] sm:$0xff]
  %v86 = vld [vmem:[%s70 + $0x78] sm:$0xff]
  %87 = vmatprep.subr.mxu0 0.0
  %88 = vmatpush1.msra.mxu0 %v86
  %89 = vmatprep.subr.mxu0 0.0
  %90 = vmatpush1.msra.mxu0 %v85
  %91 = vmatprep.subr.mxu0 0.0
  %92 = vmatpush1.msra.mxu0 %v84
  %93 = vmatprep.subr.mxu0 0.0
  %94 = vmatpush1.msra.mxu0 %v83
  %95 = vmatprep.subr.mxu0 0.0
  %96 = vmatpush1.msra.mxu0 %v82
  %97 = vmatprep.subr.mxu0 0.0
  %98 = vmatpush1.msra.mxu0 %v81
  %99 = vmatprep.subr.mxu0 0.0
  %100 = vmatpush1.msra.mxu0 %v80
  %101 = vmatprep.subr.mxu0 0.0
  %102 = vmatpush1.msra.mxu0 %v79
  %103 = vmatprep.subr.mxu0 0.0
  %104 = vmatpush1.msra.mxu0 %v78
  %105 = vmatprep.subr.mxu0 0.0
  %106 = vmatpush1.msra.mxu0 %v77
  %107 = vmatprep.subr.mxu0 0.0
  %108 = vmatpush1.msra.mxu0 %v76
  %109 = vmatprep.subr.mxu0 0.0
  %110 = vmatpush1.msra.mxu0 %v75
  %111 = vmatprep.subr.mxu0 0.0
  %112 = vmatpush1.msra.mxu0 %v74
  %113 = vmatprep.subr.mxu0 0.0
  %114 = vmatpush1.msra.mxu0 %v73
  %115 = vmatprep.subr.mxu0 0.0
  %116 = vmatpush1.msra.mxu0 %v72
  %117 = vmatprep.subr.mxu0 0.0
  %118 = vmatpush1.msra.mxu0 %v71
  %119 = vmatprep.subr.mxu0 0.0
  %120 = vmatpush2.msra.mxu0 0.0
  %121 = vmatprep.subr.mxu0 0.0
  %122 = vmatpush2.msra.mxu0 0.0
  %123 = vmatprep.subr.mxu0 0.0
  %124 = vmatpush2.msra.mxu0 0.0
  %125 = vmatprep.subr.mxu0 0.0
  %126 = vmatpush2.msra.mxu0 0.0
  %127 = vmatprep.subr.mxu0 0.0
  %128 = vmatpush2.msra.mxu0 0.0
  %129 = vmatprep.subr.mxu0 0.0
  %130 = vmatpush2.msra.mxu0 0.0
  %131 = vmatprep.subr.mxu0 0.0
  %132 = vmatpush2.msra.mxu0 0.0
  %133 = vmatprep.subr.mxu0 0.0
  %134 = vmatpush2.msra.mxu0 0.0
  %135 = vmatprep.subr.mxu0 0.0
  %136 = vmatpush2.msra.mxu0 0.0
  %137 = vmatprep.subr.mxu0 0.0
  %138 = vmatpush2.msra.mxu0 0.0
  %139 = vmatprep.subr.mxu0 0.0
  %140 = vmatpush2.msra.mxu0 0.0
  %141 = vmatprep.subr.mxu0 0.0
  %142 = vmatpush2.msra.mxu0 0.0
  %143 = vmatprep.subr.mxu0 0.0
  %144 = vmatpush2.msra.mxu0 0.0
  %145 = vmatprep.subr.mxu0 0.0
  %146 = vmatpush2.msra.mxu0 0.0
  %147 = vmatprep.subr.mxu0 0.0
  %148 = vmatpush2.msra.mxu0 0.0
  %149 = vmatprep.subr.mxu0 0.0
  %150 = vmatpush2.msra.mxu0 0.0
  %151 = vmatprep.mubr.f32.mxu0 0.0
  %152 = vmatmul.mubr.f32.gmra.mxu0 %v54
  %v153 = vpop.f32.mrf.mxu0
  %v154 = vadd.f32 0.0, %v153
  %v155 = vpop.f32.mrf.mxu0
  %156 = vmatprep.mubr.f32.mxu0 0.0
  %157 = vmatmul.mubr.f32.gmra.mxu0 %v55
  %v158 = vpop.f32.mrf.mxu0
  %v159 = vadd.f32 0.0, %v158
  %v160 = vpop.f32.mrf.mxu0
  %161 = vmatprep.mubr.f32.mxu0 0.0
  %162 = vmatmul.mubr.f32.gmra.mxu0 %v56
  %v163 = vpop.f32.mrf.mxu0
  %v164 = vadd.f32 0.0, %v163
  %v165 = vpop.f32.mrf.mxu0
  %166 = vmatprep.mubr.f32.mxu0 0.0
  %167 = vmatmul.mubr.f32.gmra.mxu0 %v57
  %v168 = vpop.f32.mrf.mxu0
  %v169 = vadd.f32 0.0, %v168
  %v170 = vpop.f32.mrf.mxu0
  %171 = vmatprep.mubr.f32.mxu0 0.0
  %172 = vmatmul.mubr.f32.gmra.mxu0 %v58
  %v173 = vpop.f32.mrf.mxu0
  %v174 = vadd.f32 0.0, %v173
  %v175 = vpop.f32.mrf.mxu0
  %176 = vmatprep.mubr.f32.mxu0 0.0
  %177 = vmatmul.mubr.f32.gmra.mxu0 %v59
  %v178 = vpop.f32.mrf.mxu0
  %v179 = vadd.f32 0.0, %v178
  %v180 = vpop.f32.mrf.mxu0
  %181 = vmatprep.mubr.f32.mxu0 0.0
  %182 = vmatmul.mubr.f32.gmra.mxu0 %v60
  %v183 = vpop.f32.mrf.mxu0
  %v184 = vadd.f32 0.0, %v183
  %v185 = vpop.f32.mrf.mxu0
  %186 = vmatprep.mubr.f32.mxu0 0.0
  %187 = vmatmul.mubr.f32.gmra.mxu0 %v61
  %v188 = vpop.f32.mrf.mxu0
  %v189 = vadd.f32 0.0, %v188
  %v190 = vpop.f32.mrf.mxu0
  %191 = vmatprep.mubr.f32.mxu0 0.0
  %192 = vmatmul.mubr.f32.gmra.mxu0 %v62
  %v193 = vpop.f32.mrf.mxu0
  %v194 = vadd.f32 0.0, %v193
  %v195 = vpop.f32.mrf.mxu0
  %196 = vmatprep.mubr.f32.mxu0 0.0
  %197 = vmatmul.mubr.f32.gmra.mxu0 %v63
  %v198 = vpop.f32.mrf.mxu0
  %v199 = vadd.f32 0.0, %v198
  %v200 = vpop.f32.mrf.mxu0
  %201 = vmatprep.mubr.f32.mxu0 0.0
  %202 = vmatmul.mubr.f32.gmra.mxu0 %v64
  %v203 = vpop.f32.mrf.mxu0
  %v204 = vadd.f32 0.0, %v203
  %v205 = vpop.f32.mrf.mxu0
  %206 = vmatprep.mubr.f32.mxu0 0.0
  %207 = vmatmul.mubr.f32.gmra.mxu0 %v65
  %v208 = vpop.f32.mrf.mxu0
  %v209 = vadd.f32 0.0, %v208
  %v210 = vpop.f32.mrf.mxu0
  %211 = vmatprep.mubr.f32.mxu0 0.0
  %212 = vmatmul.mubr.f32.gmra.mxu0 %v66
  %v213 = vpop.f32.mrf.mxu0
  %v214 = vadd.f32 0.0, %v213
  %v215 = vpop.f32.mrf.mxu0
  %216 = vmatprep.mubr.f32.mxu0 0.0
  %217 = vmatmul.mubr.f32.gmra.mxu0 %v67
  %v218 = vpop.f32.mrf.mxu0
  %v219 = vadd.f32 0.0, %v218
  %v220 = vpop.f32.mrf.mxu0
  %221 = vmatprep.mubr.f32.mxu0 0.0
  %222 = vmatmul.mubr.f32.gmra.mxu0 %v68
  %v223 = vpop.f32.mrf.mxu0
  %v224 = vadd.f32 0.0, %v223
  %v225 = vpop.f32.mrf.mxu0
  %226 = vmatprep.mubr.f32.mxu0 0.0
  %227 = vmatmul.mubr.f32.gmra.mxu0 %v69
  %v228 = vpop.f32.mrf.mxu0
  %v229 = vadd.f32 0.0, %v228
  %v230 = vpop.f32.mrf.mxu0
  %231 = vdwg.mxu0
  %v232 = vadd.f32 %v38, %v154
  %v233 = vadd.f32 %v39, %v159
  %v234 = vadd.f32 %v40, %v164
  %v235 = vadd.f32 %v41, %v169
  %v236 = vadd.f32 %v42, %v174
  %v237 = vadd.f32 %v43, %v179
  %v238 = vadd.f32 %v44, %v184
  %v239 = vadd.f32 %v45, %v189
  %v240 = vadd.f32 %v46, %v194
  %v241 = vadd.f32 %v47, %v199
  %v242 = vadd.f32 %v48, %v204
  %v243 = vadd.f32 %v49, %v209
  %v244 = vadd.f32 %v50, %v214
  %v245 = vadd.f32 %v51, %v219
  %v246 = vadd.f32 %v52, %v224
  %v247 = vadd.f32 %v53, %v229
  %248 = vst [vmem:[#allocation2] sm:$0xff] %v232
  %249 = vst [vmem:[#allocation2 + $0x8] sm:$0xff] %v233
  %250 = vst [vmem:[#allocation2 + $0x10] sm:$0xff] %v234
  %251 = vst [vmem:[#allocation2 + $0x18] sm:$0xff] %v235
  %252 = vst [vmem:[#allocation2 + $0x20] sm:$0xff] %v236
  %253 = vst [vmem:[#allocation2 + $0x28] sm:$0xff] %v237
  %254 = vst [vmem:[#allocation2 + $0x30] sm:$0xff] %v238
  %255 = vst [vmem:[#allocation2 + $0x38] sm:$0xff] %v239
  %256 = vst [vmem:[#allocation2 + $0x40] sm:$0xff] %v240
  %257 = vst [vmem:[#allocation2 + $0x48] sm:$0xff] %v241
  %258 = vst [vmem:[#allocation2 + $0x50] sm:$0xff] %v242
  %259 = vst [vmem:[#allocation2 + $0x58] sm:$0xff] %v243
  %260 = vst [vmem:[#allocation2 + $0x60] sm:$0xff] %v244
  %261 = vst [vmem:[#allocation2 + $0x68] sm:$0xff] %v245
  %262 = vst [vmem:[#allocation2 + $0x70] sm:$0xff] %v246
  %263 = vst [vmem:[#allocation2 + $0x78] sm:$0xff] %v247
  // Predicated region
  $region22: #{link_prediction_forward.3} parent=0 // pred_check
    %p264 = pneg %p17
  $region23: #{link_prediction_forward.3} parent=0 // pred_check_branch
    %266 = sbr.rel (%p264) target = $region25
  $region24: #{link_prediction_forward.3} parent=0 // pred_region
    %v267 = vld [vmem:[#allocation2] sm:$0xff]
    %v268 = vld [vmem:[#allocation2 + $0x8] sm:$0xff]
    %v269 = vld [vmem:[#allocation2 + $0x10] sm:$0xff]
    %v270 = vld [vmem:[#allocation2 + $0x18] sm:$0xff]
    %v271 = vld [vmem:[#allocation2 + $0x20] sm:$0xff]
    %v272 = vld [vmem:[#allocation2 + $0x28] sm:$0xff]
    %v273 = vld [vmem:[#allocation2 + $0x30] sm:$0xff]
    %v274 = vld [vmem:[#allocation2 + $0x38] sm:$0xff]
    %v275 = vld [vmem:[#allocation2 + $0x40] sm:$0xff]
    %v276 = vld [vmem:[#allocation2 + $0x48] sm:$0xff]
    %v277 = vld [vmem:[#allocation2 + $0x50] sm:$0xff]
    %v278 = vld [vmem:[#allocation2 + $0x58] sm:$0xff]
    %v279 = vld [vmem:[#allocation2 + $0x60] sm:$0xff]
    %v280 = vld [vmem:[#allocation2 + $0x68] sm:$0xff]
    %v281 = vld [vmem:[#allocation2 + $0x70] sm:$0xff]
    %v282 = vld [vmem:[#allocation2 + $0x78] sm:$0xff]
    %v283 = vld [vmem:[%s2] sm:$0xff]
    %v284 = vld [vmem:[%s2 + $0x8] sm:$0xff]
    %v285 = vld [vmem:[%s2 + $0x10] sm:$0xff]
    %v286 = vld [vmem:[%s2 + $0x18] sm:$0xff]
    %v287 = vld [vmem:[%s2 + $0x20] sm:$0xff]
    %v288 = vld [vmem:[%s2 + $0x28] sm:$0xff]
    %v289 = vld [vmem:[%s2 + $0x30] sm:$0xff]
    %v290 = vld [vmem:[%s2 + $0x38] sm:$0xff]
    %v291 = vld [vmem:[%s2 + $0x40] sm:$0xff]
    %v292 = vld [vmem:[%s2 + $0x48] sm:$0xff]
    %v293 = vld [vmem:[%s2 + $0x50] sm:$0xff]
    %v294 = vld [vmem:[%s2 + $0x58] sm:$0xff]
    %v295 = vld [vmem:[%s2 + $0x60] sm:$0xff]
    %v296 = vld [vmem:[%s2 + $0x68] sm:$0xff]
    %v297 = vld [vmem:[%s2 + $0x70] sm:$0xff]
    %v298 = vld [vmem:[%s2 + $0x78] sm:$0xff]
    %v299 = vld [vmem:[%s3] sm:$0x1]
    %v301 = vlaneseq
    %v302 = vshrl.u32 %v301, 7
    %v303 = vsub.s32 0, %v302
    %v304 = vrot.slane %v299, %v303
    %306 = vmatprep.subr.mxu0 0.0
    %307 = vmatpush1.msra.mxu0 %v298
    %308 = vmatprep.subr.mxu0 0.0
    %309 = vmatpush1.msra.mxu0 %v297
    %310 = vmatprep.subr.mxu0 0.0
    %311 = vmatpush1.msra.mxu0 %v296
    %312 = vmatprep.subr.mxu0 0.0
    %313 = vmatpush1.msra.mxu0 %v295
    %314 = vmatprep.subr.mxu0 0.0
    %315 = vmatpush1.msra.mxu0 %v294
    %316 = vmatprep.subr.mxu0 0.0
    %317 = vmatpush1.msra.mxu0 %v293
    %318 = vmatprep.subr.mxu0 0.0
    %319 = vmatpush1.msra.mxu0 %v292
    %320 = vmatprep.subr.mxu0 0.0
    %321 = vmatpush1.msra.mxu0 %v291
    %322 = vmatprep.subr.mxu0 0.0
    %323 = vmatpush1.msra.mxu0 %v290
    %324 = vmatprep.subr.mxu0 0.0
    %325 = vmatpush1.msra.mxu0 %v289
    %326 = vmatprep.subr.mxu0 0.0
    %327 = vmatpush1.msra.mxu0 %v288
    %328 = vmatprep.subr.mxu0 0.0
    %329 = vmatpush1.msra.mxu0 %v287
    %330 = vmatprep.subr.mxu0 0.0
    %331 = vmatpush1.msra.mxu0 %v286
    %332 = vmatprep.subr.mxu0 0.0
    %333 = vmatpush1.msra.mxu0 %v285
    %334 = vmatprep.subr.mxu0 0.0
    %335 = vmatpush1.msra.mxu0 %v284
    %336 = vmatprep.subr.mxu0 0.0
    %337 = vmatpush1.msra.mxu0 %v283
    %338 = vmatprep.subr.mxu0 0.0
    %339 = vmatpush2.msra.mxu0 0.0
    %340 = vmatprep.subr.mxu0 0.0
    %341 = vmatpush2.msra.mxu0 0.0
    %342 = vmatprep.subr.mxu0 0.0
    %343 = vmatpush2.msra.mxu0 0.0
    %344 = vmatprep.subr.mxu0 0.0
    %345 = vmatpush2.msra.mxu0 0.0
    %346 = vmatprep.subr.mxu0 0.0
    %347 = vmatpush2.msra.mxu0 0.0
    %348 = vmatprep.subr.mxu0 0.0
    %349 = vmatpush2.msra.mxu0 0.0
    %350 = vmatprep.subr.mxu0 0.0
    %351 = vmatpush2.msra.mxu0 0.0
    %352 = vmatprep.subr.mxu0 0.0
    %353 = vmatpush2.msra.mxu0 0.0
    %354 = vmatprep.subr.mxu0 0.0
    %355 = vmatpush2.msra.mxu0 0.0
    %356 = vmatprep.subr.mxu0 0.0
    %357 = vmatpush2.msra.mxu0 0.0
    %358 = vmatprep.subr.mxu0 0.0
    %359 = vmatpush2.msra.mxu0 0.0
    %360 = vmatprep.subr.mxu0 0.0
    %361 = vmatpush2.msra.mxu0 0.0
    %362 = vmatprep.subr.mxu0 0.0
    %363 = vmatpush2.msra.mxu0 0.0
    %364 = vmatprep.subr.mxu0 0.0
    %365 = vmatpush2.msra.mxu0 0.0
    %366 = vmatprep.subr.mxu0 0.0
    %367 = vmatpush2.msra.mxu0 0.0
    %368 = vmatprep.subr.mxu0 0.0
    %369 = vmatpush2.msra.mxu0 0.0
    %370 = vmatprep.mubr.f32.mxu0 0.0
    %371 = vmatmul.mubr.f32.gmra.mxu0 %v267
    %v372 = vpop.f32.mrf.mxu0
    %v373 = vadd.f32 %v304, %v372
    %v374 = vpop.f32.mrf.mxu0
    %375 = vmatprep.mubr.f32.mxu0 0.0
    %376 = vmatmul.mubr.f32.gmra.mxu0 %v268
    %v377 = vpop.f32.mrf.mxu0
    %v378 = vadd.f32 %v304, %v377
    %v379 = vpop.f32.mrf.mxu0
    %380 = vmatprep.mubr.f32.mxu0 0.0
    %381 = vmatmul.mubr.f32.gmra.mxu0 %v269
    %v382 = vpop.f32.mrf.mxu0
    %v383 = vadd.f32 %v304, %v382
    %v384 = vpop.f32.mrf.mxu0
    %385 = vmatprep.mubr.f32.mxu0 0.0
    %386 = vmatmul.mubr.f32.gmra.mxu0 %v270
    %v387 = vpop.f32.mrf.mxu0
    %v388 = vadd.f32 %v304, %v387
    %v389 = vpop.f32.mrf.mxu0
    %390 = vmatprep.mubr.f32.mxu0 0.0
    %391 = vmatmul.mubr.f32.gmra.mxu0 %v271
    %v392 = vpop.f32.mrf.mxu0
    %v393 = vadd.f32 %v304, %v392
    %v394 = vpop.f32.mrf.mxu0
    %395 = vmatprep.mubr.f32.mxu0 0.0
    %396 = vmatmul.mubr.f32.gmra.mxu0 %v272
    %v397 = vpop.f32.mrf.mxu0
    %v398 = vadd.f32 %v304, %v397
    %v399 = vpop.f32.mrf.mxu0
    %400 = vmatprep.mubr.f32.mxu0 0.0
    %401 = vmatmul.mubr.f32.gmra.mxu0 %v273
    %v402 = vpop.f32.mrf.mxu0
    %v403 = vadd.f32 %v304, %v402
    %v404 = vpop.f32.mrf.mxu0
    %405 = vmatprep.mubr.f32.mxu0 0.0
    %406 = vmatmul.mubr.f32.gmra.mxu0 %v274
    %v407 = vpop.f32.mrf.mxu0
    %v408 = vadd.f32 %v304, %v407
    %v409 = vpop.f32.mrf.mxu0
    %410 = vmatprep.mubr.f32.mxu0 0.0
    %411 = vmatmul.mubr.f32.gmra.mxu0 %v275
    %v412 = vpop.f32.mrf.mxu0
    %v413 = vadd.f32 %v304, %v412
    %v414 = vpop.f32.mrf.mxu0
    %415 = vmatprep.mubr.f32.mxu0 0.0
    %416 = vmatmul.mubr.f32.gmra.mxu0 %v276
    %v417 = vpop.f32.mrf.mxu0
    %v418 = vadd.f32 %v304, %v417
    %v419 = vpop.f32.mrf.mxu0
    %420 = vmatprep.mubr.f32.mxu0 0.0
    %421 = vmatmul.mubr.f32.gmra.mxu0 %v277
    %v422 = vpop.f32.mrf.mxu0
    %v423 = vadd.f32 %v304, %v422
    %v424 = vpop.f32.mrf.mxu0
    %425 = vmatprep.mubr.f32.mxu0 0.0
    %426 = vmatmul.mubr.f32.gmra.mxu0 %v278
    %v427 = vpop.f32.mrf.mxu0
    %v428 = vadd.f32 %v304, %v427
    %v429 = vpop.f32.mrf.mxu0
    %430 = vmatprep.mubr.f32.mxu0 0.0
    %431 = vmatmul.mubr.f32.gmra.mxu0 %v279
    %v432 = vpop.f32.mrf.mxu0
    %v433 = vadd.f32 %v304, %v432
    %v434 = vpop.f32.mrf.mxu0
    %435 = vmatprep.mubr.f32.mxu0 0.0
    %436 = vmatmul.mubr.f32.gmra.mxu0 %v280
    %v437 = vpop.f32.mrf.mxu0
    %v438 = vadd.f32 %v304, %v437
    %v439 = vpop.f32.mrf.mxu0
    %440 = vmatprep.mubr.f32.mxu0 0.0
    %441 = vmatmul.mubr.f32.gmra.mxu0 %v281
    %v442 = vpop.f32.mrf.mxu0
    %v443 = vadd.f32 %v304, %v442
    %v444 = vpop.f32.mrf.mxu0
    %445 = vmatprep.mubr.f32.mxu0 0.0
    %446 = vmatmul.mubr.f32.gmra.mxu0 %v282
    %v447 = vpop.f32.mrf.mxu0
    %v448 = vadd.f32 %v304, %v447
    %v449 = vpop.f32.mrf.mxu0
    %450 = vdwg.mxu0
    %451 = vst [vmem:[%s4] sm:$0xff] %v373
    %452 = vst [vmem:[%s4 + $0x8] sm:$0xff] %v378
    %453 = vst [vmem:[%s4 + $0x10] sm:$0xff] %v383
    %454 = vst [vmem:[%s4 + $0x18] sm:$0xff] %v388
    %455 = vst [vmem:[%s4 + $0x20] sm:$0xff] %v393
    %456 = vst [vmem:[%s4 + $0x28] sm:$0xff] %v398
    %457 = vst [vmem:[%s4 + $0x30] sm:$0xff] %v403
    %458 = vst [vmem:[%s4 + $0x38] sm:$0xff] %v408
    %459 = vst [vmem:[%s4 + $0x40] sm:$0xff] %v413
    %460 = vst [vmem:[%s4 + $0x48] sm:$0xff] %v418
    %461 = vst [vmem:[%s4 + $0x50] sm:$0xff] %v423
    %462 = vst [vmem:[%s4 + $0x58] sm:$0xff] %v428
    %463 = vst [vmem:[%s4 + $0x60] sm:$0xff] %v433
    %464 = vst [vmem:[%s4 + $0x68] sm:$0xff] %v438
    %465 = vst [vmem:[%s4 + $0x70] sm:$0xff] %v443
    %466 = vst [vmem:[%s4 + $0x78] sm:$0xff] %v448
  $region25: #{link_prediction_forward.3} parent=0 // pred_fallthru
    _
  // Predicated region
  $region26: #{link_prediction_forward.3} parent=0 // pred_check
    _
  $region27: #{link_prediction_forward.3} parent=0 // pred_check_branch
    %468 = sbr.rel (0) target = $region29
  $region28: #{link_prediction_forward.3} parent=0 // pred_region
    _
  $region29: #{link_prediction_forward.3} parent=0 // pred_fallthru
    _
  // Predicated region
  $region30: #{link_prediction_forward.3} parent=0 // pred_check
    _
  $region31: #{link_prediction_forward.3} parent=0 // pred_check_branch
    %470 = sbr.rel (0) target = $region33
  $region32: #{link_prediction_forward.3} parent=0 // pred_region
    _
  $region33: #{link_prediction_forward.3} parent=0 // pred_fallthru
    _

</llo_original>
